<compile_context>
chip_gen: v7x
topology: tpu7x:2x2x1
jax: 0.10.0
libtpu: 0.0.40
codegen_flags: <defaults>
</compile_context>

<pallas_src>
from types import SimpleNamespace

import jax
import jax.numpy as jnp
from jax.experimental import pallas as pl
from jax.experimental.pallas import tpu as pltpu


def split_power_of_2(value):
    assert value % 2 == 0, "Value must be divisible by 2"
    equal_part = value // 3 // 2 * 2
    larger_part = value - 2 * equal_part
    return (larger_part, equal_part, equal_part)


def _auto_row_blocks(B, L, Lp, C_in, Cp, itemsize):
    """Pick the number of batch-group grid blocks.

    Largest per-block batch group (fewest grid steps) whose VMEM working set stays
    under ~24 MiB (headroom for double-buffering on v7x's 64 MiB VMEM), with
    Bb = B / num_blocks a multiple of 8 (or the whole batch) so the (Bb, 128)
    output block satisfies the (8,128) rule.  Prefers >= 2 blocks when the batch
    allows it so the "parallel" grid axis can feed both v7x TensorCores.
    """
    def block_bytes(Bb):
        x_tile = 2 * Bb * L * C_in * itemsize       # double-buffered x block
        pad_scratch = Bb * Lp * C_in * itemsize     # in-kernel padded-x scratch
        inter = 2 * Bb * L * Cp * 4                 # acc + act intermediates (f32)
        return x_tile + pad_scratch + inter

    budget = 24 << 20
    candidates = [g for g in range(1, B + 1)
                  if B % g == 0 and (g == 1 or (B // g) % 8 == 0)]
    fitting = [g for g in candidates if block_bytes(B // g) <= budget]
    g = min(fitting) if fitting else max(candidates)
    # v7x megacore: split once more when the halves are still >=512-row tiles.
    if g == 1 and 2 in candidates and (B // 2) * L >= 512:
        g = 2
    return g


def invconv_classifier_forward(x_enc, params, *, kernel_size, padding, num_class,
                               num_row_blocks=None, matmul_dtype=jnp.bfloat16):
    """x_enc: (B, L, C_in) float32.  Returns logits (B, num_class) float32."""
    B, L, C_in = x_enc.shape
    K, P = kernel_size, padding
    Lp = L + 2 * P                                   # padded sequence length

    w_conv = params["w_conv"]                        # (C_out, C_in, K) PyTorch layout
    b_conv = params["b_conv"]                        # (C_out,)
    bn_g, bn_b = params["bn_gamma"], params["bn_beta"]
    bn_m, bn_v = params["bn_mean"], params["bn_var"]
    w_proj, b_proj = params["w_proj"], params["b_proj"]
    C_out = w_conv.shape[0]

    # pad channel dims up to full 128-lane tiles (lane-dense vregs everywhere).
    Cp = max(128, ((C_out + 127) // 128) * 128)
    NCp = max(128, ((num_class + 127) // 128) * 128)

    # ---- BatchNorm (eval) fold:  relu(conv*scale + shift) ----
    eps = 1e-5
    scale = bn_g * jax.lax.rsqrt(bn_v + eps)                        # (C_out,)
    shift = bn_b + (b_conv - bn_m) * scale                          # (C_out,)
    # per-tap conv weight: w_taps[k, c, o] = w_conv[o, c, k] * scale[o], padded to Cp.
    w_taps = jnp.transpose(w_conv, (2, 1, 0)) * scale[None, None, :]
    w_taps = jnp.pad(w_taps, ((0, 0), (0, 0), (0, Cp - C_out))).astype(matmul_dtype)
    shift_p = jnp.pad(shift, (0, Cp - C_out)).reshape(1, Cp).astype(jnp.float32)
    # projection padded so the single output store is lane-dense (slice afterwards).
    wp = jnp.zeros((Cp, NCp), jnp.float32).at[:C_out, :num_class].set(w_proj.T)
    bp = jnp.zeros((1, NCp), jnp.float32).at[:, :num_class].set(b_proj)

    xq = x_enc.astype(matmul_dtype)                  # halves HBM bytes of the big array
    itemsize = jnp.dtype(matmul_dtype).itemsize

    if num_row_blocks is None:
        num_row_blocks = _auto_row_blocks(B, L, Lp, C_in, Cp, itemsize)
    assert B % num_row_blocks == 0, "num_row_blocks must divide the batch"
    Bb = B // num_row_blocks
    assert num_row_blocks == 1 or Bb % 8 == 0, (
        "per-block batch must be a multiple of 8 (or the full batch) so the "
        "(Bb, 128) output block satisfies the (8,128) BlockSpec rule")

    inv_L = 1.0 / L

    # ------------------------------------------------------------------ kernel ---
    def kernel(x_ref, w_ref, shift_ref, wp_ref, bp_ref, out_ref, xpad_ref):
        # in-kernel 'same' padding: halos zeroed once, payload copied every block.
        @pl.when(pl.program_id(0) == 0)
        def _zero_halos():
            xpad_ref[...] = jnp.zeros(xpad_ref.shape, xpad_ref.dtype)

        xpad_ref[:, P:P + L, :] = x_ref[...]

        # conv as K accumulating MXU matmuls on shifted windows (in-kernel im2col);
        # f32 accumulation regardless of operand dtype.
        def tap(k):
            xs = xpad_ref[:, k:k + L, :].reshape(Bb * L, C_in)
            return jnp.dot(xs, w_ref[k], preferred_element_type=jnp.float32)

        acc = tap(0)
        for k in range(1, K):
            acc = acc + tap(k)                                       # (Bb*L, Cp)

        # folded conv-bias + BN shift, then ReLU (dropout is identity in eval).
        act = jnp.maximum(acc + shift_ref[...], 0.0)

        # AvgPool1d(seq_len): per-batch mean over L as a sublane reduce (XLU is idle).
        pooled = jnp.sum(act.reshape(Bb, L, Cp), axis=1) * inv_L     # (Bb, Cp)

        # lane-dense Linear projection.
        logits = jnp.dot(pooled, wp_ref[...], preferred_element_type=jnp.float32)
        out_ref[...] = (logits + bp_ref[...]).astype(out_ref.dtype)

    # ------------------------------------------------------------ VMEM / cost ----
    x_block = 2 * Bb * L * C_in * itemsize
    pad_scratch = Bb * Lp * C_in * itemsize
    inter = 2 * Bb * L * Cp * 4
    weights = 2 * (K * C_in * Cp * itemsize + Cp * 4 + Cp * NCp * 4 + NCp * 4)
    out_block = 2 * Bb * NCp * 4
    vmem_limit = max(32 << 20,
                     min(int(1.5 * (x_block + pad_scratch + inter + weights
                                    + out_block)) + (2 << 20), 60 << 20))

    cost = pl.CostEstimate(
        flops=2 * B * L * K * C_in * C_out + 2 * B * C_out * num_class
              + 3 * B * L * C_out,
        transcendentals=0,
        bytes_accessed=B * L * C_in * itemsize + K * C_in * Cp * itemsize
                       + Cp * NCp * 4 + B * NCp * 4)

    out = pl.pallas_call(
        kernel,
        out_shape=jax.ShapeDtypeStruct((B, NCp), jnp.float32),
        grid=(num_row_blocks,),
        in_specs=[
            pl.BlockSpec((Bb, L, C_in), lambda g: (g, 0, 0)),   # x batch-group
            pl.BlockSpec((K, C_in, Cp), lambda g: (0, 0, 0)),   # folded conv taps
            pl.BlockSpec((1, Cp), lambda g: (0, 0)),            # folded bias (f32)
            pl.BlockSpec((Cp, NCp), lambda g: (0, 0)),          # proj weight (f32)
            pl.BlockSpec((1, NCp), lambda g: (0, 0)),           # proj bias (f32)
        ],
        out_specs=pl.BlockSpec((Bb, NCp), lambda g: (g, 0)),
        scratch_shapes=[pltpu.VMEM((Bb, Lp, C_in), matmul_dtype)],
        compiler_params=pltpu.CompilerParams(
            dimension_semantics=("parallel",),
            vmem_limit_bytes=vmem_limit),
        cost_estimate=cost,
    )(xq, w_taps, shift_p, wp, bp)

    return out[:, :num_class]


# ---------------------------------------------------------------------------
# Pure-JAX reference (independent path: lax conv) for the correctness check.
# ---------------------------------------------------------------------------
def _reference_forward(x_enc, params, *, kernel_size, padding, num_class):
    w_conv = params["w_conv"]                                    # (Cout, Cin, K)
    conv = jax.lax.conv_general_dilated(
        x_enc, jnp.transpose(w_conv, (2, 1, 0)),                 # rhs (K, Cin, Cout)
        window_strides=(1,), padding=[(padding, padding)],
        dimension_numbers=("NWC", "WIO", "NWC"))                 # (B, L, Cout)
    conv = conv + params["b_conv"][None, None, :]
    eps = 1e-5
    y = (conv - params["bn_mean"]) * (params["bn_gamma"]
         * jax.lax.rsqrt(params["bn_var"] + eps)) + params["bn_beta"]
    y = jnp.maximum(y, 0.0)                                      # ReLU (dropout = id)
    pooled = jnp.mean(y, axis=1)                                 # AvgPool1d(seq_len)
    return pooled @ params["w_proj"].T + params["b_proj"]        # Linear


if __name__ == "__main__":
    # --- small, module-consistent config ---
    configs = SimpleNamespace(
        task_name="classification", invconv_type="invconv",
        seq_len=16, label_len=0, pred_len=0,
        enc_in=4, d_model=48, num_class=6, dropout=0.1, inv_ablation=0,
    )

    hidden_dims = split_power_of_2(configs.d_model)              # (16, 16, 16)
    C_out = sum(hidden_dims)                                     # 48
    kernel_size = min(50, configs.seq_len // 2)
    if kernel_size % 2 == 0:
        kernel_size += 1                                         # 9
    padding = kernel_size // 2                                   # 4

    B, L, C_in, NC = 2, configs.seq_len, configs.enc_in, configs.num_class

    # --- deterministic parameter init ---
    key = jax.random.PRNGKey(0)
    k_x, k_wc, k_bc, k_wp, k_bp, k_bn = jax.random.split(key, 6)
    params = {
        "w_conv": 0.1 * jax.random.normal(k_wc, (C_out, C_in, kernel_size), jnp.float32),
        "b_conv": 0.1 * jax.random.normal(k_bc, (C_out,), jnp.float32),
        "bn_gamma": jnp.ones((C_out,), jnp.float32),
        "bn_beta": jnp.zeros((C_out,), jnp.float32),
        "bn_mean": 0.05 * jax.random.normal(k_bn, (C_out,), jnp.float32),
        "bn_var": jnp.ones((C_out,), jnp.float32),
        "w_proj": 0.1 * jax.random.normal(k_wp, (NC, C_out), jnp.float32),
        "b_proj": 0.1 * jax.random.normal(k_bp, (NC,), jnp.float32),
    }

    x_enc = jax.random.normal(k_x, (B, L, C_in), jnp.float32)
    # (x_mark_enc, x_dec, x_mark_dec are unused by the classification path)

    # production path: bf16 matmul operands, f32 accumulation / elementwise math.
    fwd = jax.jit(lambda x: invconv_classifier_forward(
        x, params, kernel_size=kernel_size, padding=padding, num_class=NC))
    out = fwd(x_enc)
    jax.block_until_ready(out)

    # f32 path to validate the kernel structure against the reference tightly.
    fwd_f32 = jax.jit(lambda x: invconv_classifier_forward(
        x, params, kernel_size=kernel_size, padding=padding, num_class=NC,
        matmul_dtype=jnp.float32))
    out_f32 = fwd_f32(x_enc)
    jax.block_until_ready(out_f32)

    ref = _reference_forward(x_enc, params, kernel_size=kernel_size,
                             padding=padding, num_class=NC)

    assert out.shape == (B, NC) and out_f32.shape == (B, NC)
    assert bool(jnp.all(jnp.isfinite(out)))
    assert bool(jnp.allclose(out_f32, ref, atol=1e-2, rtol=1e-2)), (out_f32, ref)
    assert bool(jnp.allclose(out, ref, atol=3e-2, rtol=3e-2)), (out, ref)
    print("KERNEL_OK")
</pallas_src>

<mosaic_0001>
module attributes {stable_mosaic.version = 11 : i64} {
  func.func @kernel(%arg0: i32, %arg1: memref<2x16x4xbf16, #tpu.memory_space<vmem>>, %arg2: memref<9x4x128xbf16, #tpu.memory_space<vmem>>, %arg3: memref<1x128xf32, #tpu.memory_space<vmem>>, %arg4: memref<128x128xf32, #tpu.memory_space<vmem>>, %arg5: memref<1x128xf32, #tpu.memory_space<vmem>>, %arg6: memref<2x128xf32, #tpu.memory_space<vmem>>, %arg7: memref<2x24x4xbf16, #tpu.memory_space<vmem>>) attributes {dimension_semantics = [#tpu.dimension_semantics<parallel>], iteration_bounds = array<i64: 1>, scalar_prefetch = 0 : i64, scratch_operands = 1 : i64, tpu.core_type = #tpu.core_type<tc>, window_params = [{transform_indices = @transform_0, window_bounds = array<i64: 2, 16, 4>}, {pipeline_mode = #tpu.pipeline_mode<synchronous>, transform_indices = @transform_1, window_bounds = array<i64: 9, 4, 128>}, {pipeline_mode = #tpu.pipeline_mode<synchronous>, transform_indices = @transform_2, window_bounds = array<i64: 1, 128>}, {pipeline_mode = #tpu.pipeline_mode<synchronous>, transform_indices = @transform_3, window_bounds = array<i64: 128, 128>}, {pipeline_mode = #tpu.pipeline_mode<synchronous>, transform_indices = @transform_4, window_bounds = array<i64: 1, 128>}, {transform_indices = @transform_5, window_bounds = array<i64: 2, 128>}]} {
    %c0_i32 = arith.constant 0 : i32
    %0 = arith.cmpi eq, %arg0, %c0_i32 : i32
    %1 = arith.extui %0 : i1 to i32
    %c0_i32_0 = arith.constant 0 : i32
    %2 = arith.cmpi ne, %1, %c0_i32_0 : i32
    scf.if %2 {
      %cst_72 = arith.constant 0.000000e+00 : bf16
      %73 = vector.broadcast %cst_72 : bf16 to vector<2x24x4xbf16>
      %c0_73 = arith.constant 0 : index
      %c0_74 = arith.constant 0 : index
      %c0_75 = arith.constant 0 : index
      %74 = vector.load %arg7[%c0_73, %c0_74, %c0_75] : memref<2x24x4xbf16, #tpu.memory_space<vmem>>, vector<2x24x4xbf16>
      tpu.vector_store %arg7[%c0_73, %c0_74, %c0_75], %73 {strides = array<i32>} : memref<2x24x4xbf16, #tpu.memory_space<vmem>>, vector<2x24x4xbf16>,
    } else {
    }
    %c0 = arith.constant 0 : index
    %c0_1 = arith.constant 0 : index
    %c0_2 = arith.constant 0 : index
    %3 = vector.load %arg1[%c0, %c0_1, %c0_2] : memref<2x16x4xbf16, #tpu.memory_space<vmem>>, vector<2x16x4xbf16>
    %c0_3 = arith.constant 0 : index
    %c4 = arith.constant 4 : index
    %c0_4 = arith.constant 0 : index
    %4 = vector.load %arg7[%c0_3, %c4, %c0_4] : memref<2x24x4xbf16, #tpu.memory_space<vmem>>, vector<2x16x4xbf16>
    tpu.vector_store %arg7[%c0_3, %c4, %c0_4], %3 {strides = array<i32>} : memref<2x24x4xbf16, #tpu.memory_space<vmem>>, vector<2x16x4xbf16>,
    %c0_5 = arith.constant 0 : index
    %c0_6 = arith.constant 0 : index
    %c0_7 = arith.constant 0 : index
    %5 = vector.load %arg7[%c0_5, %c0_6, %c0_7] : memref<2x24x4xbf16, #tpu.memory_space<vmem>>, vector<2x16x4xbf16>
    %6 = vector.shape_cast %5 : vector<2x16x4xbf16> to vector<32x4xbf16>
    %c0_8 = arith.constant 0 : index
    %c0_9 = arith.constant 0 : index
    %c0_10 = arith.constant 0 : index
    %7 = vector.load %arg2[%c0_8, %c0_9, %c0_10] : memref<9x4x128xbf16, #tpu.memory_space<vmem>>, vector<1x4x128xbf16>
    %8 = vector.shape_cast %7 : vector<1x4x128xbf16> to vector<4x128xbf16>
    %cst = arith.constant dense<0.000000e+00> : vector<32x128xf32>
    %9 = tpu.matmul %6, %8, %cst {dimension_numbers = #tpu.dot_dimension_numbers<[1], [0], [0], [1], [0, 0, 1, 1], [], []>} : vector<32x4xbf16>, vector<4x128xbf16>, vector<32x128xf32> -> vector<32x128xf32>
    %c0_11 = arith.constant 0 : index
    %c1 = arith.constant 1 : index
    %c0_12 = arith.constant 0 : index
    %10 = vector.load %arg7[%c0_11, %c1, %c0_12] : memref<2x24x4xbf16, #tpu.memory_space<vmem>>, vector<2x16x4xbf16>
    %11 = vector.shape_cast %10 : vector<2x16x4xbf16> to vector<32x4xbf16>
    %c1_13 = arith.constant 1 : index
    %c0_14 = arith.constant 0 : index
    %c0_15 = arith.constant 0 : index
    %12 = vector.load %arg2[%c1_13, %c0_14, %c0_15] : memref<9x4x128xbf16, #tpu.memory_space<vmem>>, vector<1x4x128xbf16>
    %13 = vector.shape_cast %12 : vector<1x4x128xbf16> to vector<4x128xbf16>
    %cst_16 = arith.constant dense<0.000000e+00> : vector<32x128xf32>
    %14 = tpu.matmul %11, %13, %cst_16 {dimension_numbers = #tpu.dot_dimension_numbers<[1], [0], [0], [1], [0, 0, 1, 1], [], []>} : vector<32x4xbf16>, vector<4x128xbf16>, vector<32x128xf32> -> vector<32x128xf32>
    %15 = arith.addf %9, %14 : vector<32x128xf32>
    %c0_17 = arith.constant 0 : index
    %c2 = arith.constant 2 : index
    %c0_18 = arith.constant 0 : index
    %16 = vector.load %arg7[%c0_17, %c2, %c0_18] : memref<2x24x4xbf16, #tpu.memory_space<vmem>>, vector<2x16x4xbf16>
    %17 = vector.shape_cast %16 : vector<2x16x4xbf16> to vector<32x4xbf16>
    %c2_19 = arith.constant 2 : index
    %c0_20 = arith.constant 0 : index
    %c0_21 = arith.constant 0 : index
    %18 = vector.load %arg2[%c2_19, %c0_20, %c0_21] : memref<9x4x128xbf16, #tpu.memory_space<vmem>>, vector<1x4x128xbf16>
    %19 = vector.shape_cast %18 : vector<1x4x128xbf16> to vector<4x128xbf16>
    %cst_22 = arith.constant dense<0.000000e+00> : vector<32x128xf32>
    %20 = tpu.matmul %17, %19, %cst_22 {dimension_numbers = #tpu.dot_dimension_numbers<[1], [0], [0], [1], [0, 0, 1, 1], [], []>} : vector<32x4xbf16>, vector<4x128xbf16>, vector<32x128xf32> -> vector<32x128xf32>
    %21 = arith.addf %15, %20 : vector<32x128xf32>
    %c0_23 = arith.constant 0 : index
    %c3 = arith.constant 3 : index
    %c0_24 = arith.constant 0 : index
    %22 = vector.load %arg7[%c0_23, %c3, %c0_24] : memref<2x24x4xbf16, #tpu.memory_space<vmem>>, vector<2x16x4xbf16>
    %23 = vector.shape_cast %22 : vector<2x16x4xbf16> to vector<32x4xbf16>
    %c3_25 = arith.constant 3 : index
    %c0_26 = arith.constant 0 : index
    %c0_27 = arith.constant 0 : index
    %24 = vector.load %arg2[%c3_25, %c0_26, %c0_27] : memref<9x4x128xbf16, #tpu.memory_space<vmem>>, vector<1x4x128xbf16>
    %25 = vector.shape_cast %24 : vector<1x4x128xbf16> to vector<4x128xbf16>
    %cst_28 = arith.constant dense<0.000000e+00> : vector<32x128xf32>
    %26 = tpu.matmul %23, %25, %cst_28 {dimension_numbers = #tpu.dot_dimension_numbers<[1], [0], [0], [1], [0, 0, 1, 1], [], []>} : vector<32x4xbf16>, vector<4x128xbf16>, vector<32x128xf32> -> vector<32x128xf32>
    %27 = arith.addf %21, %26 : vector<32x128xf32>
    %c0_29 = arith.constant 0 : index
    %c4_30 = arith.constant 4 : index
    %c0_31 = arith.constant 0 : index
    %28 = vector.load %arg7[%c0_29, %c4_30, %c0_31] : memref<2x24x4xbf16, #tpu.memory_space<vmem>>, vector<2x16x4xbf16>
    %29 = vector.shape_cast %28 : vector<2x16x4xbf16> to vector<32x4xbf16>
    %c4_32 = arith.constant 4 : index
    %c0_33 = arith.constant 0 : index
    %c0_34 = arith.constant 0 : index
    %30 = vector.load %arg2[%c4_32, %c0_33, %c0_34] : memref<9x4x128xbf16, #tpu.memory_space<vmem>>, vector<1x4x128xbf16>
    %31 = vector.shape_cast %30 : vector<1x4x128xbf16> to vector<4x128xbf16>
    %cst_35 = arith.constant dense<0.000000e+00> : vector<32x128xf32>
    %32 = tpu.matmul %29, %31, %cst_35 {dimension_numbers = #tpu.dot_dimension_numbers<[1], [0], [0], [1], [0, 0, 1, 1], [], []>} : vector<32x4xbf16>, vector<4x128xbf16>, vector<32x128xf32> -> vector<32x128xf32>
    %33 = arith.addf %27, %32 : vector<32x128xf32>
    %c0_36 = arith.constant 0 : index
    %c5 = arith.constant 5 : index
    %c0_37 = arith.constant 0 : index
    %34 = vector.load %arg7[%c0_36, %c5, %c0_37] : memref<2x24x4xbf16, #tpu.memory_space<vmem>>, vector<2x16x4xbf16>
    %35 = vector.shape_cast %34 : vector<2x16x4xbf16> to vector<32x4xbf16>
    %c5_38 = arith.constant 5 : index
    %c0_39 = arith.constant 0 : index
    %c0_40 = arith.constant 0 : index
    %36 = vector.load %arg2[%c5_38, %c0_39, %c0_40] : memref<9x4x128xbf16, #tpu.memory_space<vmem>>, vector<1x4x128xbf16>
    %37 = vector.shape_cast %36 : vector<1x4x128xbf16> to vector<4x128xbf16>
    %cst_41 = arith.constant dense<0.000000e+00> : vector<32x128xf32>
    %38 = tpu.matmul %35, %37, %cst_41 {dimension_numbers = #tpu.dot_dimension_numbers<[1], [0], [0], [1], [0, 0, 1, 1], [], []>} : vector<32x4xbf16>, vector<4x128xbf16>, vector<32x128xf32> -> vector<32x128xf32>
    %39 = arith.addf %33, %38 : vector<32x128xf32>
    %c0_42 = arith.constant 0 : index
    %c6 = arith.constant 6 : index
    %c0_43 = arith.constant 0 : index
    %40 = vector.load %arg7[%c0_42, %c6, %c0_43] : memref<2x24x4xbf16, #tpu.memory_space<vmem>>, vector<2x16x4xbf16>
    %41 = vector.shape_cast %40 : vector<2x16x4xbf16> to vector<32x4xbf16>
    %c6_44 = arith.constant 6 : index
    %c0_45 = arith.constant 0 : index
    %c0_46 = arith.constant 0 : index
    %42 = vector.load %arg2[%c6_44, %c0_45, %c0_46] : memref<9x4x128xbf16, #tpu.memory_space<vmem>>, vector<1x4x128xbf16>
    %43 = vector.shape_cast %42 : vector<1x4x128xbf16> to vector<4x128xbf16>
    %cst_47 = arith.constant dense<0.000000e+00> : vector<32x128xf32>
    %44 = tpu.matmul %41, %43, %cst_47 {dimension_numbers = #tpu.dot_dimension_numbers<[1], [0], [0], [1], [0, 0, 1, 1], [], []>} : vector<32x4xbf16>, vector<4x128xbf16>, vector<32x128xf32> -> vector<32x128xf32>
    %45 = arith.addf %39, %44 : vector<32x128xf32>
    %c0_48 = arith.constant 0 : index
    %c7 = arith.constant 7 : index
    %c0_49 = arith.constant 0 : index
    %46 = vector.load %arg7[%c0_48, %c7, %c0_49] : memref<2x24x4xbf16, #tpu.memory_space<vmem>>, vector<2x16x4xbf16>
    %47 = vector.shape_cast %46 : vector<2x16x4xbf16> to vector<32x4xbf16>
    %c7_50 = arith.constant 7 : index
    %c0_51 = arith.constant 0 : index
    %c0_52 = arith.constant 0 : index
    %48 = vector.load %arg2[%c7_50, %c0_51, %c0_52] : memref<9x4x128xbf16, #tpu.memory_space<vmem>>, vector<1x4x128xbf16>
    %49 = vector.shape_cast %48 : vector<1x4x128xbf16> to vector<4x128xbf16>
    %cst_53 = arith.constant dense<0.000000e+00> : vector<32x128xf32>
    %50 = tpu.matmul %47, %49, %cst_53 {dimension_numbers = #tpu.dot_dimension_numbers<[1], [0], [0], [1], [0, 0, 1, 1], [], []>} : vector<32x4xbf16>, vector<4x128xbf16>, vector<32x128xf32> -> vector<32x128xf32>
    %51 = arith.addf %45, %50 : vector<32x128xf32>
    %c0_54 = arith.constant 0 : index
    %c8 = arith.constant 8 : index
    %c0_55 = arith.constant 0 : index
    %52 = vector.load %arg7[%c0_54, %c8, %c0_55] : memref<2x24x4xbf16, #tpu.memory_space<vmem>>, vector<2x16x4xbf16>
    %53 = vector.shape_cast %52 : vector<2x16x4xbf16> to vector<32x4xbf16>
    %c8_56 = arith.constant 8 : index
    %c0_57 = arith.constant 0 : index
    %c0_58 = arith.constant 0 : index
    %54 = vector.load %arg2[%c8_56, %c0_57, %c0_58] : memref<9x4x128xbf16, #tpu.memory_space<vmem>>, vector<1x4x128xbf16>
    %55 = vector.shape_cast %54 : vector<1x4x128xbf16> to vector<4x128xbf16>
    %cst_59 = arith.constant dense<0.000000e+00> : vector<32x128xf32>
    %56 = tpu.matmul %53, %55, %cst_59 {dimension_numbers = #tpu.dot_dimension_numbers<[1], [0], [0], [1], [0, 0, 1, 1], [], []>} : vector<32x4xbf16>, vector<4x128xbf16>, vector<32x128xf32> -> vector<32x128xf32>
    %57 = arith.addf %51, %56 : vector<32x128xf32>
    %c0_60 = arith.constant 0 : index
    %c0_61 = arith.constant 0 : index
    %58 = vector.load %arg3[%c0_60, %c0_61] : memref<1x128xf32, #tpu.memory_space<vmem>>, vector<1x128xf32>
    %59 = vector.broadcast %58 : vector<1x128xf32> to vector<32x128xf32>
    %60 = arith.addf %57, %59 : vector<32x128xf32>
    %cst_62 = arith.constant 0.000000e+00 : f32
    %61 = vector.broadcast %cst_62 : f32 to vector<32x128xf32>
    %62 = arith.maximumf %60, %61 : vector<32x128xf32>
    %63 = vector.shape_cast %62 : vector<32x128xf32> to vector<2x16x128xf32>
    %cst_63 = arith.constant dense<0.000000e+00> : vector<2x128xf32>
    %64 = vector.multi_reduction <add>, %63, %cst_63 [1] : vector<2x16x128xf32> to vector<2x128xf32>
    %cst_64 = arith.constant 6.250000e-02 : f32
    %65 = vector.broadcast %cst_64 : f32 to vector<2x128xf32>
    %66 = arith.mulf %64, %65 : vector<2x128xf32>
    %c0_65 = arith.constant 0 : index
    %c0_66 = arith.constant 0 : index
    %67 = vector.load %arg4[%c0_65, %c0_66] : memref<128x128xf32, #tpu.memory_space<vmem>>, vector<128x128xf32>
    %cst_67 = arith.constant dense<0.000000e+00> : vector<2x128xf32>
    %68 = tpu.matmul %66, %67, %cst_67 {dimension_numbers = #tpu.dot_dimension_numbers<[1], [0], [0], [1], [0, 0, 1, 1], [], []>} : vector<2x128xf32>, vector<128x128xf32>, vector<2x128xf32> -> vector<2x128xf32>
    %c0_68 = arith.constant 0 : index
    %c0_69 = arith.constant 0 : index
    %69 = vector.load %arg5[%c0_68, %c0_69] : memref<1x128xf32, #tpu.memory_space<vmem>>, vector<1x128xf32>
    %70 = vector.broadcast %69 : vector<1x128xf32> to vector<2x128xf32>
    %71 = arith.addf %68, %70 : vector<2x128xf32>
    %c0_70 = arith.constant 0 : index
    %c0_71 = arith.constant 0 : index
    %72 = vector.load %arg6[%c0_70, %c0_71] : memref<2x128xf32, #tpu.memory_space<vmem>>, vector<2x128xf32>
    tpu.vector_store %arg6[%c0_70, %c0_71], %71 {strides = array<i32>} : memref<2x128xf32, #tpu.memory_space<vmem>>, vector<2x128xf32>,
    return
  }
  func.func @transform_0(%arg0: i32) -> (i32, i32, i32) {
    %c0_i32 = arith.constant 0 : i32
    %c0_i32_0 = arith.constant 0 : i32
    %c0_i32_1 = arith.constant 0 : i32
    return %arg0, %c0_i32, %c0_i32_0 : i32, i32, i32
  }
  func.func @transform_1(%arg0: i32) -> (i32, i32, i32) {
    %c0_i32 = arith.constant 0 : i32
    %c0_i32_0 = arith.constant 0 : i32
    %c0_i32_1 = arith.constant 0 : i32
    %c0_i32_2 = arith.constant 0 : i32
    return %c0_i32, %c0_i32_0, %c0_i32_1 : i32, i32, i32
  }
  func.func @transform_2(%arg0: i32) -> (i32, i32) {
    %c0_i32 = arith.constant 0 : i32
    %c0_i32_0 = arith.constant 0 : i32
    %c0_i32_1 = arith.constant 0 : i32
    return %c0_i32, %c0_i32_0 : i32, i32
  }
  func.func @transform_3(%arg0: i32) -> (i32, i32) {
    %c0_i32 = arith.constant 0 : i32
    %c0_i32_0 = arith.constant 0 : i32
    %c0_i32_1 = arith.constant 0 : i32
    return %c0_i32, %c0_i32_0 : i32, i32
  }
  func.func @transform_4(%arg0: i32) -> (i32, i32) {
    %c0_i32 = arith.constant 0 : i32
    %c0_i32_0 = arith.constant 0 : i32
    %c0_i32_1 = arith.constant 0 : i32
    return %c0_i32, %c0_i32_0 : i32, i32
  }
  func.func @transform_5(%arg0: i32) -> (i32, i32) {
    %c0_i32 = arith.constant 0 : i32
    %c0_i32_0 = arith.constant 0 : i32
    return %arg0, %c0_i32 : i32, i32
  }
}

</mosaic_0001>

<llo_original>
// kernel: _lambda_.1
$region0: #{_lambda_.1}
  #allocation0 [shape = 'u32[]', space=smem, size = 0x4, offset = 0x4, fixed_abs, tag = 'smem constant byte address 0x4 - core index']
  #allocation1 [shape = 'u32[144,128]{1,0:T(1,128)}', space=vmem, size = 0x12000, scoped, tag = 'internal scratch']
  #allocation2 [shape = 'bf16[2,24,4]{2,1,0:T(8,128)(2,1)}', space=vmem, size = 0x3000, scoped, tag = 'scratch operand']
  %s0 = inlined_call_operand.vmem [shape: bf16[2,16,4], index: 0, kind: input, shape index: {}]
  %s1 = inlined_call_operand.vmem [shape: bf16[9,4,128], index: 1, kind: input, shape index: {}]
  %s2 = inlined_call_operand.vmem [shape: f32[1,128], index: 2, kind: input, shape index: {}]
  %s3 = inlined_call_operand.hbm [shape: f32[128,128], index: 3, kind: input, shape index: {}]
  %s4 = inlined_call_operand.vmem [shape: f32[1,128], index: 4, kind: input, shape index: {}]
  %s5 = inlined_call_operand.hbm [shape: f32[2,128], index: 5, kind: output, shape index: {}]
  %s6 = sld [smem:[#allocation0]]
  $region38: #{_lambda_.1} parent=0
    _
  %s8 = ssub.s32 1, %s6
  %s9 = scalar_select 0, %s8, %s6
  $region1: #{_lambda_.1} parent=0
    #allocation3 [shape = 'u8[65536]{0}', space=vmem, size = 0x10000, scoped, tag = 'input window, operand 3, single buffered']
    #allocation4 [shape = 's32[1]{0}', space=sflag, size = 0x4, scoped, tag = 'scoped memory for _lambda_.1']
    #allocation5 [shape = 's32[1]{0}', space=sflag, size = 0x4, scoped, tag = 'scoped memory for _lambda_.1']
    #allocation6 [shape = 'u8[1024]{0}', space=vmem, size = 0x400, scoped, tag = 'output window, operand 0, single buffered']
    %10 = vsyncpa [#allocation4], 0
    %11 = vsyncpa [#allocation5], 0
    // Predicated region
    $region2: #{_lambda_.1} parent=1 // pred_check
      _
    $region3: #{_lambda_.1} parent=1 // pred_check_branch
      %13 = sbr.rel (0) target = $region5
    $region4: #{_lambda_.1} parent=1 // pred_region
      _
    $region5: #{_lambda_.1} parent=1 // pred_fallthru
      _
    // Predicated region
    $region6: #{_lambda_.1} parent=1 // pred_check
      _
    $region7: #{_lambda_.1} parent=1 // pred_check_branch
      %15 = sbr.rel (0) target = $region9
    $region8: #{_lambda_.1} parent=1 // pred_region
      _
    $region9: #{_lambda_.1} parent=1 // pred_fallthru
      _
    // Predicated region
    $region10: #{_lambda_.1} parent=1 // pred_check
      _
    $region11: #{_lambda_.1} parent=1 // pred_check_branch
      %17 = sbr.rel (0) target = $region13
    $region12: #{_lambda_.1} parent=1 // pred_region
      _
    $region13: #{_lambda_.1} parent=1 // pred_fallthru
      _
    // Predicated region
    $region14: #{_lambda_.1} parent=1 // pred_check
      _
    $region15: #{_lambda_.1} parent=1 // pred_check_branch
      %19 = sbr.rel (0) target = $region17
    $region16: #{_lambda_.1} parent=1 // pred_region
      %s21 = ssub.s32 2048, 2048
      %22 = vsyncadd [#allocation4], %s21
      %s23 = sshll.u32 [#allocation3], 4
      %s24 = int_to_ptr.vmem [resolvable:$true] %s23
      %29 = dma.hbm_to_vmem [thread:$0]  %s3, 2048, %s24, [#allocation4], 128, 128, 8
    $region17: #{_lambda_.1} parent=1 // pred_fallthru
      _
    // Predicated region
    $region18: #{_lambda_.1} parent=1 // pred_check
      _
    $region19: #{_lambda_.1} parent=1 // pred_check_branch
      %31 = sbr.rel (0) target = $region21
    $region20: #{_lambda_.1} parent=1 // pred_region
      _
    $region21: #{_lambda_.1} parent=1 // pred_fallthru
      _
    // Predicated region
    $region22: #{_lambda_.1} parent=1 // pred_check
      _
    $region23: #{_lambda_.1} parent=1 // pred_check_branch
      %33 = sbr.rel (0) target = $region25
    $region24: #{_lambda_.1} parent=1 // pred_region
      %34 = dma.done [#allocation4], 2048
    $region25: #{_lambda_.1} parent=1 // pred_fallthru
      _
    %p36 = scmp.eq.s32.totalorder 0, 0
    // Predicated region
    $region26: #{_lambda_.1} parent=1 // pred_check
      %p37 = pneg %p36
    $region27: #{_lambda_.1} parent=1 // pred_check_branch
      %39 = sbr.rel (%p37) target = $region29
    $region28: #{_lambda_.1} parent=1 // pred_region
      %vm40 = vcmask 27648
      %41 = vst.msk [vmem:[#allocation2] sm:$0xf] %vm40, 0
      %42 = vst.msk [vmem:[#allocation2 + $0x4] sm:$0xf] %vm40, 0
      %43 = vst.msk [vmem:[#allocation2 + $0x8] sm:$0xf] %vm40, 0
      %44 = vst.msk [vmem:[#allocation2 + $0xc] sm:$0xf] %vm40, 0
      %45 = vst.msk [vmem:[#allocation2 + $0x10] sm:$0xf] %vm40, 0
      %46 = vst.msk [vmem:[#allocation2 + $0x14] sm:$0xf] %vm40, 0
    $region29: #{_lambda_.1} parent=1 // pred_fallthru
      _
    %v47 = vld [vmem:[%s0] sm:$0xf]
    %v48 = vld [vmem:[%s0 + $0x4] sm:$0xf]
    %v49 = vld [vmem:[%s0 + $0x8] sm:$0xf]
    %v50 = vld [vmem:[%s0 + $0xc] sm:$0xf]
    %vm55 = vcmask 1041408
    %vm56 = vcmask 1045508
    %vm57 = vmor %vm55, %vm56
    %v58 = vrot.slane %v47, 6
    %v59 = vrot.slane %v58, 4
    %v60 = vrot.slane %v48, 6
    %v61 = vsel %vm57, %v59, %v60
    %v62 = vrot.slane %v60, 4
    %v63 = vrot.slane %v49, 6
    %v64 = vrot.slane %v63, 4
    %v65 = vrot.slane %v50, 6
    %v66 = vsel %vm57, %v64, %v65
    %v67 = vrot.slane %v65, 4
    %vm74 = vcmask 27650
    %75 = vst.msk [vmem:[#allocation2] sm:$0xc] %vm74, %v58
    %vm76 = vcmask 27648
    %77 = vst.msk [vmem:[#allocation2 + $0x4] sm:$0xf] %vm76, %v61
    %vm78 = vcmask 25600
    %79 = vst.msk [vmem:[#allocation2 + $0x8] sm:$0x3] %vm78, %v62
    %80 = vst.msk [vmem:[#allocation2 + $0xc] sm:$0xc] %vm74, %v63
    %81 = vst.msk [vmem:[#allocation2 + $0x10] sm:$0xf] %vm76, %v66
    %82 = vst.msk [vmem:[#allocation2 + $0x14] sm:$0x3] %vm78, %v67
    %v83 = vld [vmem:[#allocation2] sm:$0xf]
    %v84 = vld [vmem:[#allocation2 + $0x4] sm:$0xf]
    %v85 = vld [vmem:[#allocation2 + $0xc] sm:$0xf]
    %v86 = vld [vmem:[#allocation2 + $0x10] sm:$0xf]
    %v87 = vld [vmem:[%s1] sm:$0x3]
    %v88 = vld [vmem:[#allocation2 + $0x8] sm:$0x1]
    %v89 = vld [vmem:[#allocation2 + $0x14] sm:$0x1]
    %vm90 = vsmask.f32 3328
    %vm91 = vsmask.f32 7440
    %vm92 = vmor %vm90, %vm91
    %v94 = vshrl.u32 %v83, 16
    %v96 = vrot.slane %v94, 4
    %v97 = vshll.u32 %v83, 16
    %v99 = vrot.slane %v97, 5
    %v100 = vor.u32 %v96, %v99
    %v101 = vrot.slane %v100, 4
    %v103 = vshll.u32 %v84, 16
    %v105 = vrot.slane %v103, 5
    %v106 = vsel %vm92, %v101, %v105
    %v107 = vshrl.u32 %v84, 16
    %v109 = vrot.slane %v107, 4
    %v110 = vor.u32 %v109, %v105
    %v111 = vrot.slane %v110, 4
    %v113 = vshll.u32 %v88, 16
    %v115 = vrot.slane %v113, 5
    %v116 = vsel %vm92, %v111, %v115
    %v118 = vshrl.u32 %v85, 16
    %v120 = vrot.slane %v118, 4
    %v121 = vshll.u32 %v85, 16
    %v123 = vrot.slane %v121, 5
    %v124 = vor.u32 %v120, %v123
    %v125 = vrot.slane %v124, 4
    %v127 = vshll.u32 %v86, 16
    %v129 = vrot.slane %v127, 5
    %v130 = vsel %vm92, %v125, %v129
    %v131 = vshrl.u32 %v86, 16
    %v133 = vrot.slane %v131, 4
    %v134 = vor.u32 %v133, %v129
    %v135 = vrot.slane %v134, 4
    %v137 = vshll.u32 %v89, 16
    %v139 = vrot.slane %v137, 5
    %v140 = vsel %vm92, %v135, %v139
    %s141 = scalar_lea.vmem %s1, 2
    %v142 = vld [vmem:[%s141] sm:$0x3]
    %v143 = vunpack.c.l.b16 %v106
    %v144 = vunpack.c.l.b16 %v116
    %v145 = vunpack.c.l.b16 %v130
    %v146 = vunpack.c.l.b16 %v140
    %v147 = vpack.c.b16 %v144, %v143
    %v148 = vpack.c.b16 %v146, %v145
    %vm149 = vcmask 31744
    %v151 = vsel %vm149, %v147, 0
    %v154 = vsel %vm149, %v148, 0
    %vm156 = vcmask 1041408
    %v158 = vsel %vm156, %v142, 0
    %160 = vmatprep.subr.bf16.mxu0 0
    %161 = vmatpush1.bf16.msra.mxu0 %v158
    %162 = vmatprep.subr.bf16.mxu0 0
    %163 = vmatpush1.bf16.msra.mxu0 0
    %164 = vmatprep.subr.bf16.mxu0 0
    %165 = vmatpush1.bf16.msra.mxu0 0
    %166 = vmatprep.subr.bf16.mxu0 0
    %167 = vmatpush1.bf16.msra.mxu0 0
    %168 = vmatprep.subr.bf16.mxu0 0
    %169 = vmatpush1.bf16.msra.mxu0 0
    %170 = vmatprep.subr.bf16.mxu0 0
    %171 = vmatpush1.bf16.msra.mxu0 0
    %172 = vmatprep.subr.bf16.mxu0 0
    %173 = vmatpush1.bf16.msra.mxu0 0
    %174 = vmatprep.subr.bf16.mxu0 0
    %175 = vmatpush1.bf16.msra.mxu0 0
    %176 = vmatprep.subr.bf16.mxu0 0
    %177 = vmatpush1.bf16.msra.mxu0 0
    %178 = vmatprep.subr.bf16.mxu0 0
    %179 = vmatpush1.bf16.msra.mxu0 0
    %180 = vmatprep.subr.bf16.mxu0 0
    %181 = vmatpush1.bf16.msra.mxu0 0
    %182 = vmatprep.subr.bf16.mxu0 0
    %183 = vmatpush1.bf16.msra.mxu0 0
    %184 = vmatprep.subr.bf16.mxu0 0
    %185 = vmatpush1.bf16.msra.mxu0 0
    %186 = vmatprep.subr.bf16.mxu0 0
    %187 = vmatpush1.bf16.msra.mxu0 0
    %188 = vmatprep.subr.bf16.mxu0 0
    %189 = vmatpush1.bf16.msra.mxu0 0
    %190 = vmatprep.subr.bf16.mxu0 0
    %191 = vmatpush1.bf16.msra.mxu0 0
    %192 = vmatprep.mubr.bf16.mxu0 0
    %193 = vmatmul.mubr.bf16.gmra.mrb[0].mxu0 %v151
    %v194 = vpop.f32.mrb[0].mxu0
    %v195 = vadd.f32 0.0, %v194
    %v196 = vpop.f32.mrb[0].mxu0
    %v197 = vpop.f32.mrb[0].mxu0
    %v198 = vadd.f32 0.0, %v197
    %v199 = vpop.f32.mrb[0].mxu0
    %200 = vmatprep.mubr.bf16.mxu0 0
    %201 = vmatmul.mubr.bf16.gmra.mrb[0].mxu0 %v154
    %v202 = vpop.f32.mrb[0].mxu0
    %v203 = vadd.f32 0.0, %v202
    %v204 = vpop.f32.mrb[0].mxu0
    %v205 = vpop.f32.mrb[0].mxu0
    %v206 = vadd.f32 0.0, %v205
    %v207 = vpop.f32.mrb[0].mxu0
    %208 = vdwg.mxu0
    %v213 = vunpack.c.l.b16 %v83
    %v214 = vunpack.c.l.b16 %v84
    %v215 = vunpack.c.l.b16 %v85
    %v216 = vunpack.c.l.b16 %v86
    %v217 = vpack.c.b16 %v214, %v213
    %v218 = vpack.c.b16 %v216, %v215
    %v220 = vsel %vm149, %v217, 0
    %v223 = vsel %vm149, %v218, 0
    %v226 = vsel %vm156, %v87, 0
    %228 = vmatprep.subr.bf16.mxu0 0
    %229 = vmatpush1.bf16.msra.mxu0 %v226
    %230 = vmatprep.subr.bf16.mxu0 0
    %231 = vmatpush1.bf16.msra.mxu0 0
    %232 = vmatprep.subr.bf16.mxu0 0
    %233 = vmatpush1.bf16.msra.mxu0 0
    %234 = vmatprep.subr.bf16.mxu0 0
    %235 = vmatpush1.bf16.msra.mxu0 0
    %236 = vmatprep.subr.bf16.mxu0 0
    %237 = vmatpush1.bf16.msra.mxu0 0
    %238 = vmatprep.subr.bf16.mxu0 0
    %239 = vmatpush1.bf16.msra.mxu0 0
    %240 = vmatprep.subr.bf16.mxu0 0
    %241 = vmatpush1.bf16.msra.mxu0 0
    %242 = vmatprep.subr.bf16.mxu0 0
    %243 = vmatpush1.bf16.msra.mxu0 0
    %244 = vmatprep.subr.bf16.mxu0 0
    %245 = vmatpush1.bf16.msra.mxu0 0
    %246 = vmatprep.subr.bf16.mxu0 0
    %247 = vmatpush1.bf16.msra.mxu0 0
    %248 = vmatprep.subr.bf16.mxu0 0
    %249 = vmatpush1.bf16.msra.mxu0 0
    %250 = vmatprep.subr.bf16.mxu0 0
    %251 = vmatpush1.bf16.msra.mxu0 0
    %252 = vmatprep.subr.bf16.mxu0 0
    %253 = vmatpush1.bf16.msra.mxu0 0
    %254 = vmatprep.subr.bf16.mxu0 0
    %255 = vmatpush1.bf16.msra.mxu0 0
    %256 = vmatprep.subr.bf16.mxu0 0
    %257 = vmatpush1.bf16.msra.mxu0 0
    %258 = vmatprep.subr.bf16.mxu0 0
    %259 = vmatpush1.bf16.msra.mxu0 0
    %260 = vmatprep.mubr.bf16.mxu0 0
    %261 = vmatmul.mubr.bf16.gmra.mrb[0].mxu0 %v220
    %v262 = vpop.f32.mrb[0].mxu0
    %v263 = vadd.f32 %v195, %v262
    %v264 = vpop.f32.mrb[0].mxu0
    %v265 = vpop.f32.mrb[0].mxu0
    %v266 = vadd.f32 %v198, %v265
    %v267 = vpop.f32.mrb[0].mxu0
    %268 = vmatprep.mubr.bf16.mxu0 0
    %269 = vmatmul.mubr.bf16.gmra.mrb[0].mxu0 %v223
    %v270 = vpop.f32.mrb[0].mxu0
    %v271 = vadd.f32 %v203, %v270
    %v272 = vpop.f32.mrb[0].mxu0
    %v273 = vpop.f32.mrb[0].mxu0
    %v274 = vadd.f32 %v206, %v273
    %v275 = vpop.f32.mrb[0].mxu0
    %276 = vdwg.mxu0
    %v277 = vld [vmem:[#allocation2] sm:$0xe]
    %v278 = vld [vmem:[#allocation2 + $0xc] sm:$0xe]
    %vm283 = vcmask 1042432
    %vm284 = vcmask 1046532
    %vm285 = vmor %vm283, %vm284
    %v286 = vrot.slane %v277, 5
    %v287 = vrot.slane %v286, 4
    %v288 = vrot.slane %v84, 5
    %v289 = vsel %vm285, %v287, %v288
    %v290 = vrot.slane %v288, 4
    %v291 = vrot.slane %v88, 5
    %v292 = vsel %vm285, %v290, %v291
    %v293 = vrot.slane %v278, 5
    %v294 = vrot.slane %v293, 4
    %v295 = vrot.slane %v86, 5
    %v296 = vsel %vm285, %v294, %v295
    %v297 = vrot.slane %v295, 4
    %v298 = vrot.slane %v89, 5
    %v299 = vsel %vm285, %v297, %v298
    %s300 = scalar_lea.vmem %s1, 4
    %v301 = vld [vmem:[%s300] sm:$0x3]
    %v302 = vunpack.c.l.b16 %v289
    %v303 = vunpack.c.l.b16 %v292
    %v304 = vunpack.c.l.b16 %v296
    %v305 = vunpack.c.l.b16 %v299
    %v306 = vpack.c.b16 %v303, %v302
    %v307 = vpack.c.b16 %v305, %v304
    %v309 = vsel %vm149, %v306, 0
    %v312 = vsel %vm149, %v307, 0
    %v315 = vsel %vm156, %v301, 0
    %317 = vmatprep.subr.bf16.mxu0 0
    %318 = vmatpush1.bf16.msra.mxu0 %v315
    %319 = vmatprep.subr.bf16.mxu0 0
    %320 = vmatpush1.bf16.msra.mxu0 0
    %321 = vmatprep.subr.bf16.mxu0 0
    %322 = vmatpush1.bf16.msra.mxu0 0
    %323 = vmatprep.subr.bf16.mxu0 0
    %324 = vmatpush1.bf16.msra.mxu0 0
    %325 = vmatprep.subr.bf16.mxu0 0
    %326 = vmatpush1.bf16.msra.mxu0 0
    %327 = vmatprep.subr.bf16.mxu0 0
    %328 = vmatpush1.bf16.msra.mxu0 0
    %329 = vmatprep.subr.bf16.mxu0 0
    %330 = vmatpush1.bf16.msra.mxu0 0
    %331 = vmatprep.subr.bf16.mxu0 0
    %332 = vmatpush1.bf16.msra.mxu0 0
    %333 = vmatprep.subr.bf16.mxu0 0
    %334 = vmatpush1.bf16.msra.mxu0 0
    %335 = vmatprep.subr.bf16.mxu0 0
    %336 = vmatpush1.bf16.msra.mxu0 0
    %337 = vmatprep.subr.bf16.mxu0 0
    %338 = vmatpush1.bf16.msra.mxu0 0
    %339 = vmatprep.subr.bf16.mxu0 0
    %340 = vmatpush1.bf16.msra.mxu0 0
    %341 = vmatprep.subr.bf16.mxu0 0
    %342 = vmatpush1.bf16.msra.mxu0 0
    %343 = vmatprep.subr.bf16.mxu0 0
    %344 = vmatpush1.bf16.msra.mxu0 0
    %345 = vmatprep.subr.bf16.mxu0 0
    %346 = vmatpush1.bf16.msra.mxu0 0
    %347 = vmatprep.subr.bf16.mxu0 0
    %348 = vmatpush1.bf16.msra.mxu0 0
    %349 = vmatprep.mubr.bf16.mxu0 0
    %350 = vmatmul.mubr.bf16.gmra.mrb[0].mxu0 %v309
    %v351 = vpop.f32.mrb[0].mxu0
    %v352 = vadd.f32 0.0, %v351
    %v353 = vpop.f32.mrb[0].mxu0
    %v354 = vpop.f32.mrb[0].mxu0
    %v355 = vadd.f32 0.0, %v354
    %v356 = vpop.f32.mrb[0].mxu0
    %357 = vmatprep.mubr.bf16.mxu0 0
    %358 = vmatmul.mubr.bf16.gmra.mrb[0].mxu0 %v312
    %v359 = vpop.f32.mrb[0].mxu0
    %v360 = vadd.f32 0.0, %v359
    %v361 = vpop.f32.mrb[0].mxu0
    %v362 = vpop.f32.mrb[0].mxu0
    %v363 = vadd.f32 0.0, %v362
    %v364 = vpop.f32.mrb[0].mxu0
    %365 = vdwg.mxu0
    %v366 = vadd.f32 %v263, %v352
    %v367 = vadd.f32 %v266, %v355
    %v368 = vadd.f32 %v271, %v360
    %v369 = vadd.f32 %v274, %v363
    %v370 = vld [vmem:[#allocation2 + $0x8] sm:$0x3]
    %v371 = vld [vmem:[#allocation2 + $0x14] sm:$0x3]
    %vm372 = vsmask.f32 2304
    %vm373 = vsmask.f32 6416
    %vm374 = vmor %vm372, %vm373
    %v376 = vshrl.u32 %v277, 16
    %v378 = vrot.slane %v376, 5
    %v379 = vshll.u32 %v277, 16
    %v381 = vrot.slane %v379, 6
    %v382 = vor.u32 %v378, %v381
    %v383 = vrot.slane %v382, 4
    %v384 = vrot.slane %v107, 5
    %v385 = vrot.slane %v103, 6
    %v386 = vor.u32 %v384, %v385
    %v387 = vsel %vm374, %v383, %v386
    %v388 = vrot.slane %v386, 4
    %v390 = vshrl.u32 %v370, 16
    %v392 = vrot.slane %v390, 5
    %v393 = vshll.u32 %v370, 16
    %v395 = vrot.slane %v393, 6
    %v396 = vor.u32 %v392, %v395
    %v397 = vsel %vm374, %v388, %v396
    %v399 = vshrl.u32 %v278, 16
    %v401 = vrot.slane %v399, 5
    %v402 = vshll.u32 %v278, 16
    %v404 = vrot.slane %v402, 6
    %v405 = vor.u32 %v401, %v404
    %v406 = vrot.slane %v405, 4
    %v407 = vrot.slane %v131, 5
    %v408 = vrot.slane %v127, 6
    %v409 = vor.u32 %v407, %v408
    %v410 = vsel %vm374, %v406, %v409
    %v411 = vrot.slane %v409, 4
    %v413 = vshrl.u32 %v371, 16
    %v415 = vrot.slane %v413, 5
    %v416 = vshll.u32 %v371, 16
    %v418 = vrot.slane %v416, 6
    %v419 = vor.u32 %v415, %v418
    %v420 = vsel %vm374, %v411, %v419
    %s421 = scalar_lea.vmem %s1, 6
    %v422 = vld [vmem:[%s421] sm:$0x3]
    %v423 = vunpack.c.l.b16 %v387
    %v424 = vunpack.c.l.b16 %v397
    %v425 = vunpack.c.l.b16 %v410
    %v426 = vunpack.c.l.b16 %v420
    %v427 = vpack.c.b16 %v424, %v423
    %v428 = vpack.c.b16 %v426, %v425
    %v430 = vsel %vm149, %v427, 0
    %v433 = vsel %vm149, %v428, 0
    %v436 = vsel %vm156, %v422, 0
    %438 = vmatprep.subr.bf16.mxu0 0
    %439 = vmatpush1.bf16.msra.mxu0 %v436
    %440 = vmatprep.subr.bf16.mxu0 0
    %441 = vmatpush1.bf16.msra.mxu0 0
    %442 = vmatprep.subr.bf16.mxu0 0
    %443 = vmatpush1.bf16.msra.mxu0 0
    %444 = vmatprep.subr.bf16.mxu0 0
    %445 = vmatpush1.bf16.msra.mxu0 0
    %446 = vmatprep.subr.bf16.mxu0 0
    %447 = vmatpush1.bf16.msra.mxu0 0
    %448 = vmatprep.subr.bf16.mxu0 0
    %449 = vmatpush1.bf16.msra.mxu0 0
    %450 = vmatprep.subr.bf16.mxu0 0
    %451 = vmatpush1.bf16.msra.mxu0 0
    %452 = vmatprep.subr.bf16.mxu0 0
    %453 = vmatpush1.bf16.msra.mxu0 0
    %454 = vmatprep.subr.bf16.mxu0 0
    %455 = vmatpush1.bf16.msra.mxu0 0
    %456 = vmatprep.subr.bf16.mxu0 0
    %457 = vmatpush1.bf16.msra.mxu0 0
    %458 = vmatprep.subr.bf16.mxu0 0
    %459 = vmatpush1.bf16.msra.mxu0 0
    %460 = vmatprep.subr.bf16.mxu0 0
    %461 = vmatpush1.bf16.msra.mxu0 0
    %462 = vmatprep.subr.bf16.mxu0 0
    %463 = vmatpush1.bf16.msra.mxu0 0
    %464 = vmatprep.subr.bf16.mxu0 0
    %465 = vmatpush1.bf16.msra.mxu0 0
    %466 = vmatprep.subr.bf16.mxu0 0
    %467 = vmatpush1.bf16.msra.mxu0 0
    %468 = vmatprep.subr.bf16.mxu0 0
    %469 = vmatpush1.bf16.msra.mxu0 0
    %470 = vmatprep.mubr.bf16.mxu0 0
    %471 = vmatmul.mubr.bf16.gmra.mrb[0].mxu0 %v430
    %v472 = vpop.f32.mrb[0].mxu0
    %v473 = vadd.f32 0.0, %v472
    %v474 = vpop.f32.mrb[0].mxu0
    %v475 = vpop.f32.mrb[0].mxu0
    %v476 = vadd.f32 0.0, %v475
    %v477 = vpop.f32.mrb[0].mxu0
    %478 = vmatprep.mubr.bf16.mxu0 0
    %479 = vmatmul.mubr.bf16.gmra.mrb[0].mxu0 %v433
    %v480 = vpop.f32.mrb[0].mxu0
    %v481 = vadd.f32 0.0, %v480
    %v482 = vpop.f32.mrb[0].mxu0
    %v483 = vpop.f32.mrb[0].mxu0
    %v484 = vadd.f32 0.0, %v483
    %v485 = vpop.f32.mrb[0].mxu0
    %486 = vdwg.mxu0
    %v487 = vadd.f32 %v366, %v473
    %v488 = vadd.f32 %v367, %v476
    %v489 = vadd.f32 %v368, %v481
    %v490 = vadd.f32 %v369, %v484
    %v491 = vld [vmem:[#allocation2] sm:$0xc]
    %v492 = vld [vmem:[#allocation2 + $0xc] sm:$0xc]
    %v497 = vrot.slane %v491, 6
    %v498 = vrot.slane %v497, 4
    %v499 = vrot.slane %v84, 6
    %v500 = vsel %vm57, %v498, %v499
    %v501 = vrot.slane %v499, 4
    %v502 = vrot.slane %v370, 6
    %v503 = vsel %vm57, %v501, %v502
    %v504 = vrot.slane %v492, 6
    %v505 = vrot.slane %v504, 4
    %v506 = vrot.slane %v86, 6
    %v507 = vsel %vm57, %v505, %v506
    %v508 = vrot.slane %v506, 4
    %v509 = vrot.slane %v371, 6
    %v510 = vsel %vm57, %v508, %v509
    %s511 = scalar_lea.vmem %s1, 8
    %v512 = vld [vmem:[%s511] sm:$0x3]
    %v513 = vunpack.c.l.b16 %v500
    %v514 = vunpack.c.l.b16 %v503
    %v515 = vunpack.c.l.b16 %v507
    %v516 = vunpack.c.l.b16 %v510
    %v517 = vpack.c.b16 %v514, %v513
    %v518 = vpack.c.b16 %v516, %v515
    %v520 = vsel %vm149, %v517, 0
    %v523 = vsel %vm149, %v518, 0
    %v526 = vsel %vm156, %v512, 0
    %528 = vmatprep.subr.bf16.mxu0 0
    %529 = vmatpush1.bf16.msra.mxu0 %v526
    %530 = vmatprep.subr.bf16.mxu0 0
    %531 = vmatpush1.bf16.msra.mxu0 0
    %532 = vmatprep.subr.bf16.mxu0 0
    %533 = vmatpush1.bf16.msra.mxu0 0
    %534 = vmatprep.subr.bf16.mxu0 0
    %535 = vmatpush1.bf16.msra.mxu0 0
    %536 = vmatprep.subr.bf16.mxu0 0
    %537 = vmatpush1.bf16.msra.mxu0 0
    %538 = vmatprep.subr.bf16.mxu0 0
    %539 = vmatpush1.bf16.msra.mxu0 0
    %540 = vmatprep.subr.bf16.mxu0 0
    %541 = vmatpush1.bf16.msra.mxu0 0
    %542 = vmatprep.subr.bf16.mxu0 0
    %543 = vmatpush1.bf16.msra.mxu0 0
    %544 = vmatprep.subr.bf16.mxu0 0
    %545 = vmatpush1.bf16.msra.mxu0 0
    %546 = vmatprep.subr.bf16.mxu0 0
    %547 = vmatpush1.bf16.msra.mxu0 0
    %548 = vmatprep.subr.bf16.mxu0 0
    %549 = vmatpush1.bf16.msra.mxu0 0
    %550 = vmatprep.subr.bf16.mxu0 0
    %551 = vmatpush1.bf16.msra.mxu0 0
    %552 = vmatprep.subr.bf16.mxu0 0
    %553 = vmatpush1.bf16.msra.mxu0 0
    %554 = vmatprep.subr.bf16.mxu0 0
    %555 = vmatpush1.bf16.msra.mxu0 0
    %556 = vmatprep.subr.bf16.mxu0 0
    %557 = vmatpush1.bf16.msra.mxu0 0
    %558 = vmatprep.subr.bf16.mxu0 0
    %559 = vmatpush1.bf16.msra.mxu0 0
    %560 = vmatprep.mubr.bf16.mxu0 0
    %561 = vmatmul.mubr.bf16.gmra.mrb[0].mxu0 %v520
    %v562 = vpop.f32.mrb[0].mxu0
    %v563 = vadd.f32 0.0, %v562
    %v564 = vpop.f32.mrb[0].mxu0
    %v565 = vpop.f32.mrb[0].mxu0
    %v566 = vadd.f32 0.0, %v565
    %v567 = vpop.f32.mrb[0].mxu0
    %568 = vmatprep.mubr.bf16.mxu0 0
    %569 = vmatmul.mubr.bf16.gmra.mrb[0].mxu0 %v523
    %v570 = vpop.f32.mrb[0].mxu0
    %v571 = vadd.f32 0.0, %v570
    %v572 = vpop.f32.mrb[0].mxu0
    %v573 = vpop.f32.mrb[0].mxu0
    %v574 = vadd.f32 0.0, %v573
    %v575 = vpop.f32.mrb[0].mxu0
    %576 = vdwg.mxu0
    %v577 = vadd.f32 %v487, %v563
    %v578 = vadd.f32 %v488, %v566
    %v579 = vadd.f32 %v489, %v571
    %v580 = vadd.f32 %v490, %v574
    %v581 = vld [vmem:[#allocation2 + $0x8] sm:$0x7]
    %v582 = vld [vmem:[#allocation2 + $0x14] sm:$0x7]
    %vm583 = vsmask.f32 1280
    %vm584 = vsmask.f32 5392
    %vm585 = vmor %vm583, %vm584
    %v587 = vshrl.u32 %v491, 16
    %v589 = vrot.slane %v587, 6
    %v590 = vshll.u32 %v491, 16
    %v592 = vrot.slane %v590, 7
    %v593 = vor.u32 %v589, %v592
    %v594 = vrot.slane %v593, 4
    %v595 = vrot.slane %v107, 6
    %v596 = vrot.slane %v103, 7
    %v597 = vor.u32 %v595, %v596
    %v598 = vsel %vm585, %v594, %v597
    %v599 = vrot.slane %v597, 4
    %v601 = vshrl.u32 %v581, 16
    %v603 = vrot.slane %v601, 6
    %v604 = vshll.u32 %v581, 16
    %v606 = vrot.slane %v604, 7
    %v607 = vor.u32 %v603, %v606
    %v608 = vsel %vm585, %v599, %v607
    %v610 = vshrl.u32 %v492, 16
    %v612 = vrot.slane %v610, 6
    %v613 = vshll.u32 %v492, 16
    %v615 = vrot.slane %v613, 7
    %v616 = vor.u32 %v612, %v615
    %v617 = vrot.slane %v616, 4
    %v618 = vrot.slane %v131, 6
    %v619 = vrot.slane %v127, 7
    %v620 = vor.u32 %v618, %v619
    %v621 = vsel %vm585, %v617, %v620
    %v622 = vrot.slane %v620, 4
    %v624 = vshrl.u32 %v582, 16
    %v626 = vrot.slane %v624, 6
    %v627 = vshll.u32 %v582, 16
    %v629 = vrot.slane %v627, 7
    %v630 = vor.u32 %v626, %v629
    %v631 = vsel %vm585, %v622, %v630
    %s632 = scalar_lea.vmem %s1, 10
    %v633 = vld [vmem:[%s632] sm:$0x3]
    %v634 = vunpack.c.l.b16 %v598
    %v635 = vunpack.c.l.b16 %v608
    %v636 = vunpack.c.l.b16 %v621
    %v637 = vunpack.c.l.b16 %v631
    %v638 = vpack.c.b16 %v635, %v634
    %v639 = vpack.c.b16 %v637, %v636
    %v641 = vsel %vm149, %v638, 0
    %v644 = vsel %vm149, %v639, 0
    %v647 = vsel %vm156, %v633, 0
    %649 = vmatprep.subr.bf16.mxu0 0
    %650 = vmatpush1.bf16.msra.mxu0 %v647
    %651 = vmatprep.subr.bf16.mxu0 0
    %652 = vmatpush1.bf16.msra.mxu0 0
    %653 = vmatprep.subr.bf16.mxu0 0
    %654 = vmatpush1.bf16.msra.mxu0 0
    %655 = vmatprep.subr.bf16.mxu0 0
    %656 = vmatpush1.bf16.msra.mxu0 0
    %657 = vmatprep.subr.bf16.mxu0 0
    %658 = vmatpush1.bf16.msra.mxu0 0
    %659 = vmatprep.subr.bf16.mxu0 0
    %660 = vmatpush1.bf16.msra.mxu0 0
    %661 = vmatprep.subr.bf16.mxu0 0
    %662 = vmatpush1.bf16.msra.mxu0 0
    %663 = vmatprep.subr.bf16.mxu0 0
    %664 = vmatpush1.bf16.msra.mxu0 0
    %665 = vmatprep.subr.bf16.mxu0 0
    %666 = vmatpush1.bf16.msra.mxu0 0
    %667 = vmatprep.subr.bf16.mxu0 0
    %668 = vmatpush1.bf16.msra.mxu0 0
    %669 = vmatprep.subr.bf16.mxu0 0
    %670 = vmatpush1.bf16.msra.mxu0 0
    %671 = vmatprep.subr.bf16.mxu0 0
    %672 = vmatpush1.bf16.msra.mxu0 0
    %673 = vmatprep.subr.bf16.mxu0 0
    %674 = vmatpush1.bf16.msra.mxu0 0
    %675 = vmatprep.subr.bf16.mxu0 0
    %676 = vmatpush1.bf16.msra.mxu0 0
    %677 = vmatprep.subr.bf16.mxu0 0
    %678 = vmatpush1.bf16.msra.mxu0 0
    %679 = vmatprep.subr.bf16.mxu0 0
    %680 = vmatpush1.bf16.msra.mxu0 0
    %681 = vmatprep.mubr.bf16.mxu0 0
    %682 = vmatmul.mubr.bf16.gmra.mrb[0].mxu0 %v641
    %v683 = vpop.f32.mrb[0].mxu0
    %v684 = vadd.f32 0.0, %v683
    %v685 = vpop.f32.mrb[0].mxu0
    %v686 = vpop.f32.mrb[0].mxu0
    %v687 = vadd.f32 0.0, %v686
    %v688 = vpop.f32.mrb[0].mxu0
    %689 = vmatprep.mubr.bf16.mxu0 0
    %690 = vmatmul.mubr.bf16.gmra.mrb[0].mxu0 %v644
    %v691 = vpop.f32.mrb[0].mxu0
    %v692 = vadd.f32 0.0, %v691
    %v693 = vpop.f32.mrb[0].mxu0
    %v694 = vpop.f32.mrb[0].mxu0
    %v695 = vadd.f32 0.0, %v694
    %v696 = vpop.f32.mrb[0].mxu0
    %697 = vdwg.mxu0
    %v698 = vadd.f32 %v577, %v684
    %v699 = vadd.f32 %v578, %v687
    %v700 = vadd.f32 %v579, %v692
    %v701 = vadd.f32 %v580, %v695
    %v702 = vld [vmem:[#allocation2] sm:$0x8]
    %v703 = vld [vmem:[#allocation2 + $0xc] sm:$0x8]
    %vm708 = vcmask 1040384
    %vm709 = vcmask 1044484
    %vm710 = vmor %vm708, %vm709
    %v711 = vrot.slane %v702, 7
    %v712 = vrot.slane %v711, 4
    %v713 = vrot.slane %v84, 7
    %v714 = vsel %vm710, %v712, %v713
    %v715 = vrot.slane %v713, 4
    %v716 = vrot.slane %v581, 7
    %v717 = vsel %vm710, %v715, %v716
    %v718 = vrot.slane %v703, 7
    %v719 = vrot.slane %v718, 4
    %v720 = vrot.slane %v86, 7
    %v721 = vsel %vm710, %v719, %v720
    %v722 = vrot.slane %v720, 4
    %v723 = vrot.slane %v582, 7
    %v724 = vsel %vm710, %v722, %v723
    %s725 = scalar_lea.vmem %s1, 12
    %v726 = vld [vmem:[%s725] sm:$0x3]
    %v727 = vunpack.c.l.b16 %v714
    %v728 = vunpack.c.l.b16 %v717
    %v729 = vunpack.c.l.b16 %v721
    %v730 = vunpack.c.l.b16 %v724
    %v731 = vpack.c.b16 %v728, %v727
    %v732 = vpack.c.b16 %v730, %v729
    %v734 = vsel %vm149, %v731, 0
    %v737 = vsel %vm149, %v732, 0
    %v740 = vsel %vm156, %v726, 0
    %742 = vmatprep.subr.bf16.mxu0 0
    %743 = vmatpush1.bf16.msra.mxu0 %v740
    %744 = vmatprep.subr.bf16.mxu0 0
    %745 = vmatpush1.bf16.msra.mxu0 0
    %746 = vmatprep.subr.bf16.mxu0 0
    %747 = vmatpush1.bf16.msra.mxu0 0
    %748 = vmatprep.subr.bf16.mxu0 0
    %749 = vmatpush1.bf16.msra.mxu0 0
    %750 = vmatprep.subr.bf16.mxu0 0
    %751 = vmatpush1.bf16.msra.mxu0 0
    %752 = vmatprep.subr.bf16.mxu0 0
    %753 = vmatpush1.bf16.msra.mxu0 0
    %754 = vmatprep.subr.bf16.mxu0 0
    %755 = vmatpush1.bf16.msra.mxu0 0
    %756 = vmatprep.subr.bf16.mxu0 0
    %757 = vmatpush1.bf16.msra.mxu0 0
    %758 = vmatprep.subr.bf16.mxu0 0
    %759 = vmatpush1.bf16.msra.mxu0 0
    %760 = vmatprep.subr.bf16.mxu0 0
    %761 = vmatpush1.bf16.msra.mxu0 0
    %762 = vmatprep.subr.bf16.mxu0 0
    %763 = vmatpush1.bf16.msra.mxu0 0
    %764 = vmatprep.subr.bf16.mxu0 0
    %765 = vmatpush1.bf16.msra.mxu0 0
    %766 = vmatprep.subr.bf16.mxu0 0
    %767 = vmatpush1.bf16.msra.mxu0 0
    %768 = vmatprep.subr.bf16.mxu0 0
    %769 = vmatpush1.bf16.msra.mxu0 0
    %770 = vmatprep.subr.bf16.mxu0 0
    %771 = vmatpush1.bf16.msra.mxu0 0
    %772 = vmatprep.subr.bf16.mxu0 0
    %773 = vmatpush1.bf16.msra.mxu0 0
    %774 = vmatprep.mubr.bf16.mxu0 0
    %775 = vmatmul.mubr.bf16.gmra.mrb[0].mxu0 %v734
    %v776 = vpop.f32.mrb[0].mxu0
    %v777 = vadd.f32 0.0, %v776
    %v778 = vpop.f32.mrb[0].mxu0
    %v779 = vpop.f32.mrb[0].mxu0
    %v780 = vadd.f32 0.0, %v779
    %v781 = vpop.f32.mrb[0].mxu0
    %782 = vmatprep.mubr.bf16.mxu0 0
    %783 = vmatmul.mubr.bf16.gmra.mrb[0].mxu0 %v737
    %v784 = vpop.f32.mrb[0].mxu0
    %v785 = vadd.f32 0.0, %v784
    %v786 = vpop.f32.mrb[0].mxu0
    %v787 = vpop.f32.mrb[0].mxu0
    %v788 = vadd.f32 0.0, %v787
    %v789 = vpop.f32.mrb[0].mxu0
    %790 = vdwg.mxu0
    %v791 = vadd.f32 %v698, %v777
    %v792 = vadd.f32 %v699, %v780
    %v793 = vadd.f32 %v700, %v785
    %v794 = vadd.f32 %v701, %v788
    %v795 = vld [vmem:[#allocation2 + $0x8] sm:$0xf]
    %v796 = vld [vmem:[#allocation2 + $0x14] sm:$0xf]
    %vm797 = vsmask.f32 256
    %vm798 = vsmask.f32 4368
    %vm799 = vmor %vm797, %vm798
    %v801 = vshrl.u32 %v702, 16
    %v803 = vrot.slane %v801, 7
    %v804 = vrot.slane %v803, 4
    %v805 = vrot.slane %v107, 7
    %v806 = vor.u32 %v805, %v103
    %v807 = vsel %vm799, %v804, %v806
    %v808 = vrot.slane %v805, 4
    %v810 = vshrl.u32 %v795, 16
    %v812 = vrot.slane %v810, 7
    %v813 = vshll.u32 %v795, 16
    %v815 = vor.u32 %v812, %v813
    %v816 = vsel %vm799, %v808, %v815
    %v818 = vshrl.u32 %v703, 16
    %v820 = vrot.slane %v818, 7
    %v821 = vrot.slane %v820, 4
    %v822 = vrot.slane %v131, 7
    %v823 = vor.u32 %v822, %v127
    %v824 = vsel %vm799, %v821, %v823
    %v825 = vrot.slane %v822, 4
    %v827 = vshrl.u32 %v796, 16
    %v829 = vrot.slane %v827, 7
    %v830 = vshll.u32 %v796, 16
    %v832 = vor.u32 %v829, %v830
    %v833 = vsel %vm799, %v825, %v832
    %s834 = scalar_lea.vmem %s1, 14
    %v835 = vld [vmem:[%s834] sm:$0x3]
    %v836 = vunpack.c.l.b16 %v807
    %v837 = vunpack.c.l.b16 %v816
    %v838 = vunpack.c.l.b16 %v824
    %v839 = vunpack.c.l.b16 %v833
    %v840 = vpack.c.b16 %v837, %v836
    %v841 = vpack.c.b16 %v839, %v838
    %v843 = vsel %vm149, %v840, 0
    %v846 = vsel %vm149, %v841, 0
    %v849 = vsel %vm156, %v835, 0
    %851 = vmatprep.subr.bf16.mxu0 0
    %852 = vmatpush1.bf16.msra.mxu0 %v849
    %853 = vmatprep.subr.bf16.mxu0 0
    %854 = vmatpush1.bf16.msra.mxu0 0
    %855 = vmatprep.subr.bf16.mxu0 0
    %856 = vmatpush1.bf16.msra.mxu0 0
    %857 = vmatprep.subr.bf16.mxu0 0
    %858 = vmatpush1.bf16.msra.mxu0 0
    %859 = vmatprep.subr.bf16.mxu0 0
    %860 = vmatpush1.bf16.msra.mxu0 0
    %861 = vmatprep.subr.bf16.mxu0 0
    %862 = vmatpush1.bf16.msra.mxu0 0
    %863 = vmatprep.subr.bf16.mxu0 0
    %864 = vmatpush1.bf16.msra.mxu0 0
    %865 = vmatprep.subr.bf16.mxu0 0
    %866 = vmatpush1.bf16.msra.mxu0 0
    %867 = vmatprep.subr.bf16.mxu0 0
    %868 = vmatpush1.bf16.msra.mxu0 0
    %869 = vmatprep.subr.bf16.mxu0 0
    %870 = vmatpush1.bf16.msra.mxu0 0
    %871 = vmatprep.subr.bf16.mxu0 0
    %872 = vmatpush1.bf16.msra.mxu0 0
    %873 = vmatprep.subr.bf16.mxu0 0
    %874 = vmatpush1.bf16.msra.mxu0 0
    %875 = vmatprep.subr.bf16.mxu0 0
    %876 = vmatpush1.bf16.msra.mxu0 0
    %877 = vmatprep.subr.bf16.mxu0 0
    %878 = vmatpush1.bf16.msra.mxu0 0
    %879 = vmatprep.subr.bf16.mxu0 0
    %880 = vmatpush1.bf16.msra.mxu0 0
    %881 = vmatprep.subr.bf16.mxu0 0
    %882 = vmatpush1.bf16.msra.mxu0 0
    %883 = vmatprep.mubr.bf16.mxu0 0
    %884 = vmatmul.mubr.bf16.gmra.mrb[0].mxu0 %v843
    %v885 = vpop.f32.mrb[0].mxu0
    %v886 = vadd.f32 0.0, %v885
    %v887 = vpop.f32.mrb[0].mxu0
    %v888 = vpop.f32.mrb[0].mxu0
    %v889 = vadd.f32 0.0, %v888
    %v890 = vpop.f32.mrb[0].mxu0
    %891 = vmatprep.mubr.bf16.mxu0 0
    %892 = vmatmul.mubr.bf16.gmra.mrb[0].mxu0 %v846
    %v893 = vpop.f32.mrb[0].mxu0
    %v894 = vadd.f32 0.0, %v893
    %v895 = vpop.f32.mrb[0].mxu0
    %v896 = vpop.f32.mrb[0].mxu0
    %v897 = vadd.f32 0.0, %v896
    %v898 = vpop.f32.mrb[0].mxu0
    %899 = vdwg.mxu0
    %v900 = vadd.f32 %v791, %v886
    %v901 = vadd.f32 %v792, %v889
    %v902 = vadd.f32 %v793, %v894
    %v903 = vadd.f32 %v794, %v897
    %s904 = scalar_lea.vmem %s1, 16
    %v905 = vld [vmem:[%s904] sm:$0x3]
    %v908 = vunpack.c.l.b16 %v795
    %v909 = vunpack.c.l.b16 %v796
    %v910 = vpack.c.b16 %v908, %v214
    %v911 = vpack.c.b16 %v909, %v216
    %v913 = vsel %vm149, %v910, 0
    %v916 = vsel %vm149, %v911, 0
    %v919 = vsel %vm156, %v905, 0
    %921 = vmatprep.subr.bf16.mxu0 0
    %922 = vmatpush1.bf16.msra.mxu0 %v919
    %923 = vmatprep.subr.bf16.mxu0 0
    %924 = vmatpush1.bf16.msra.mxu0 0
    %925 = vmatprep.subr.bf16.mxu0 0
    %926 = vmatpush1.bf16.msra.mxu0 0
    %927 = vmatprep.subr.bf16.mxu0 0
    %928 = vmatpush1.bf16.msra.mxu0 0
    %929 = vmatprep.subr.bf16.mxu0 0
    %930 = vmatpush1.bf16.msra.mxu0 0
    %931 = vmatprep.subr.bf16.mxu0 0
    %932 = vmatpush1.bf16.msra.mxu0 0
    %933 = vmatprep.subr.bf16.mxu0 0
    %934 = vmatpush1.bf16.msra.mxu0 0
    %935 = vmatprep.subr.bf16.mxu0 0
    %936 = vmatpush1.bf16.msra.mxu0 0
    %937 = vmatprep.subr.bf16.mxu0 0
    %938 = vmatpush1.bf16.msra.mxu0 0
    %939 = vmatprep.subr.bf16.mxu0 0
    %940 = vmatpush1.bf16.msra.mxu0 0
    %941 = vmatprep.subr.bf16.mxu0 0
    %942 = vmatpush1.bf16.msra.mxu0 0
    %943 = vmatprep.subr.bf16.mxu0 0
    %944 = vmatpush1.bf16.msra.mxu0 0
    %945 = vmatprep.subr.bf16.mxu0 0
    %946 = vmatpush1.bf16.msra.mxu0 0
    %947 = vmatprep.subr.bf16.mxu0 0
    %948 = vmatpush1.bf16.msra.mxu0 0
    %949 = vmatprep.subr.bf16.mxu0 0
    %950 = vmatpush1.bf16.msra.mxu0 0
    %951 = vmatprep.subr.bf16.mxu0 0
    %952 = vmatpush1.bf16.msra.mxu0 0
    %953 = vmatprep.mubr.bf16.mxu0 0
    %954 = vmatmul.mubr.bf16.gmra.mrb[0].mxu0 %v913
    %v955 = vpop.f32.mrb[0].mxu0
    %v956 = vadd.f32 0.0, %v955
    %v957 = vpop.f32.mrb[0].mxu0
    %v958 = vpop.f32.mrb[0].mxu0
    %v959 = vadd.f32 0.0, %v958
    %v960 = vpop.f32.mrb[0].mxu0
    %961 = vmatprep.mubr.bf16.mxu0 0
    %962 = vmatmul.mubr.bf16.gmra.mrb[0].mxu0 %v916
    %v963 = vpop.f32.mrb[0].mxu0
    %v964 = vadd.f32 0.0, %v963
    %v965 = vpop.f32.mrb[0].mxu0
    %v966 = vpop.f32.mrb[0].mxu0
    %v967 = vadd.f32 0.0, %v966
    %v968 = vpop.f32.mrb[0].mxu0
    %969 = vdwg.mxu0
    %v970 = vadd.f32 %v900, %v956
    %v971 = vadd.f32 %v901, %v959
    %v972 = vadd.f32 %v902, %v964
    %v973 = vadd.f32 %v903, %v967
    %v974 = vld [vmem:[%s2] sm:$0x1]
    %v976 = vlaneseq
    %v977 = vshrl.u32 %v976, 7
    %v978 = vsub.s32 0, %v977
    %v979 = vrot.slane %v974, %v978
    %v981 = vadd.f32 %v970, %v979
    %v982 = vadd.f32 %v971, %v979
    %v983 = vadd.f32 %v972, %v979
    %v984 = vadd.f32 %v973, %v979
    %v985 = vmax.f32 %v981, 0.0
    %v986 = vmax.f32 %v982, 0.0
    %v987 = vmax.f32 %v983, 0.0
    %v988 = vmax.f32 %v984, 0.0
    %v989 = vadd.f32 %v985, %v986
    %v990 = vrot.slane %v989, 4
    %v991 = vadd.f32 %v989, %v990
    %v992 = vrot.slane %v991, 2
    %v993 = vadd.f32 %v991, %v992
    %v994 = vrot.slane %v993, 1
    %v995 = vadd.f32 %v993, %v994
    %v996 = vadd.f32 %v987, %v988
    %v997 = vrot.slane %v996, 4
    %v998 = vadd.f32 %v996, %v997
    %v999 = vrot.slane %v998, 2
    %v1000 = vadd.f32 %v998, %v999
    %v1001 = vrot.slane %v1000, 1
    %v1002 = vadd.f32 %v1000, %v1001
    %v1003 = vmul.f32 %v995, 0.0625
    %v1004 = vmul.f32 %v1002, 0.0625
    %v1005 = vld [vmem:[#allocation3] sm:$0xff]
    %v1006 = vld [vmem:[#allocation3 + $0x8] sm:$0xff]
    %v1007 = vld [vmem:[#allocation3 + $0x10] sm:$0xff]
    %v1008 = vld [vmem:[#allocation3 + $0x18] sm:$0xff]
    %v1009 = vld [vmem:[#allocation3 + $0x20] sm:$0xff]
    %v1010 = vld [vmem:[#allocation3 + $0x28] sm:$0xff]
    %v1011 = vld [vmem:[#allocation3 + $0x30] sm:$0xff]
    %v1012 = vld [vmem:[#allocation3 + $0x38] sm:$0xff]
    %v1013 = vld [vmem:[#allocation3 + $0x40] sm:$0xff]
    %v1014 = vld [vmem:[#allocation3 + $0x48] sm:$0xff]
    %v1015 = vld [vmem:[#allocation3 + $0x50] sm:$0xff]
    %v1016 = vld [vmem:[#allocation3 + $0x58] sm:$0xff]
    %v1017 = vld [vmem:[#allocation3 + $0x60] sm:$0xff]
    %v1018 = vld [vmem:[#allocation3 + $0x68] sm:$0xff]
    %v1019 = vld [vmem:[#allocation3 + $0x70] sm:$0xff]
    %v1020 = vld [vmem:[#allocation3 + $0x78] sm:$0xff]
    %v1021 = vld [vmem:[%s4] sm:$0x1]
    %v1023 = vlaneseq
    %v1024 = vshrl.u32 %v1023, 7
    %v1025 = vsub.s32 0, %v1024
    %v1026 = vrot.slane %v1021, %v1025
    %vm1030 = vcmask 1041409
    %v1031 = vsel %vm1030, %v1004, %v1003
    %1033 = vmatprep.subr.mxu0 0.0
    %1034 = vmatpush1.msra.mxu0 %v1005
    %1035 = vmatprep.subr.mxu0 0.0
    %1036 = vmatpush1.msra.mxu0 %v1006
    %1037 = vmatprep.subr.mxu0 0.0
    %1038 = vmatpush1.msra.mxu0 %v1007
    %1039 = vmatprep.subr.mxu0 0.0
    %1040 = vmatpush1.msra.mxu0 %v1008
    %1041 = vmatprep.subr.mxu0 0.0
    %1042 = vmatpush1.msra.mxu0 %v1009
    %1043 = vmatprep.subr.mxu0 0.0
    %1044 = vmatpush1.msra.mxu0 %v1010
    %1045 = vmatprep.subr.mxu0 0.0
    %1046 = vmatpush1.msra.mxu0 %v1011
    %1047 = vmatprep.subr.mxu0 0.0
    %1048 = vmatpush1.msra.mxu0 %v1012
    %1049 = vmatprep.subr.mxu0 0.0
    %1050 = vmatpush1.msra.mxu0 %v1013
    %1051 = vmatprep.subr.mxu0 0.0
    %1052 = vmatpush1.msra.mxu0 %v1014
    %1053 = vmatprep.subr.mxu0 0.0
    %1054 = vmatpush1.msra.mxu0 %v1015
    %1055 = vmatprep.subr.mxu0 0.0
    %1056 = vmatpush1.msra.mxu0 %v1016
    %1057 = vmatprep.subr.mxu0 0.0
    %1058 = vmatpush1.msra.mxu0 %v1017
    %1059 = vmatprep.subr.mxu0 0.0
    %1060 = vmatpush1.msra.mxu0 %v1018
    %1061 = vmatprep.subr.mxu0 0.0
    %1062 = vmatpush1.msra.mxu0 %v1019
    %1063 = vmatprep.subr.mxu0 0.0
    %1064 = vmatpush1.msra.mxu0 %v1020
    %1065 = vmatprep.subr.mxu0 0.0
    %1066 = vmatpush1.msra.mxu0 0.0
    %1067 = vmatprep.subr.mxu0 0.0
    %1068 = vmatpush1.msra.mxu0 0.0
    %1069 = vmatprep.subr.mxu0 0.0
    %1070 = vmatpush1.msra.mxu0 0.0
    %1071 = vmatprep.subr.mxu0 0.0
    %1072 = vmatpush1.msra.mxu0 0.0
    %1073 = vmatprep.subr.mxu0 0.0
    %1074 = vmatpush1.msra.mxu0 0.0
    %1075 = vmatprep.subr.mxu0 0.0
    %1076 = vmatpush1.msra.mxu0 0.0
    %1077 = vmatprep.subr.mxu0 0.0
    %1078 = vmatpush1.msra.mxu0 0.0
    %1079 = vmatprep.subr.mxu0 0.0
    %1080 = vmatpush1.msra.mxu0 0.0
    %1081 = vmatprep.subr.mxu0 0.0
    %1082 = vmatpush1.msra.mxu0 0.0
    %1083 = vmatprep.subr.mxu0 0.0
    %1084 = vmatpush1.msra.mxu0 0.0
    %1085 = vmatprep.subr.mxu0 0.0
    %1086 = vmatpush1.msra.mxu0 0.0
    %1087 = vmatprep.subr.mxu0 0.0
    %1088 = vmatpush1.msra.mxu0 0.0
    %1089 = vmatprep.subr.mxu0 0.0
    %1090 = vmatpush1.msra.mxu0 0.0
    %1091 = vmatprep.subr.mxu0 0.0
    %1092 = vmatpush1.msra.mxu0 0.0
    %1093 = vmatprep.subr.mxu0 0.0
    %1094 = vmatpush1.msra.mxu0 0.0
    %1095 = vmatprep.subr.mxu0 0.0
    %1096 = vmatpush1.msra.mxu0 0.0
    %1097 = vmatprep.mubr.f32.mxu0 0.0
    %1098 = vmatmul.mubr.f32.gmra.mrb[0].mxu0 %v1031
    %v1099 = vpop.f32.mrb[0].mxu0
    %v1100 = vadd.f32 %v1026, %v1099
    %v1101 = vpop.f32.mrb[0].mxu0
    %1102 = vdwg.mxu0
    %1103 = vst [vmem:[#allocation6] sm:$0x3] %v1100
    // Predicated region
    $region30: #{_lambda_.1} parent=1 // pred_check
      _
    $region31: #{_lambda_.1} parent=1 // pred_check_branch
      %1105 = sbr.rel (0) target = $region33
    $region32: #{_lambda_.1} parent=1 // pred_region
      %s1107 = ssub.s32 32, 32
      %1108 = vsyncadd [#allocation5], %s1107
      %s1110 = sshll.u32 [#allocation6], 4
      %s1111 = int_to_ptr.vmem [resolvable:$true] %s1110
      %1113 = dma.vmem_to_hbm [thread:$0]  %s1111, 32, %s5, [#allocation5]
    $region33: #{_lambda_.1} parent=1 // pred_fallthru
      _
    // Predicated region
    $region34: #{_lambda_.1} parent=1 // pred_check
      _
    $region35: #{_lambda_.1} parent=1 // pred_check_branch
      %1115 = sbr.rel (0) target = $region37
    $region36: #{_lambda_.1} parent=1 // pred_region
      %1116 = dma.done [#allocation5], 32
    $region37: #{_lambda_.1} parent=1 // pred_fallthru
      _
    %1117 = vsyncpa [#allocation4], 1
    %1118 = vsyncpa [#allocation5], 1

</llo_original>
